<compile_context>
chip_gen: v5e
topology: v5e:2x2
jax: 0.10.0
libtpu: 0.0.40
codegen_flags: <defaults>
</compile_context>

<pallas_src>
import math
from typing import NamedTuple

import jax
import jax.numpy as jnp
from jax.experimental import pallas as pl
from jax.experimental.pallas import tpu as pltpu


def _round_up(x, m):
    return (x + m - 1) // m * m


def _sublane_align(dtype):
    """Second-to-last-dim alignment for a dtype (8 for f32, 16 for bf16)."""
    itemsize = jnp.dtype(dtype).itemsize
    return 8 * max(1, 4 // itemsize)


def _pick_tile(dim, align, cap):
    """Largest tile (multiple of `align`, <= cap) minimizing padding of `dim`."""
    dim_r = _round_up(max(int(dim), 1), align)
    cap_r = max(align, min(_round_up(int(cap), align), dim_r))
    best_t, best_waste = align, None
    t = align
    while t <= cap_r:
        waste = _round_up(dim_r, t) - dim_r
        if best_waste is None or waste < best_waste or (
                waste == best_waste and t > best_t):
            best_t, best_waste = t, waste
        t += align
    return best_t


# ----------------------------------------------------------------------------
# Fused kernel: org matmul + bias + LoRA-up epilogue, all on the MXU.
# ----------------------------------------------------------------------------
def _make_lora_kernel(acc_is_out):
    """y = x @ W + b + down @ U (coef folded into U); f32 accumulation."""

    def kernel(x_ref, w_ref, b_ref, d_ref, u_ref, o_ref, *scratch):
        # x_ref: (tm, tk)   w_ref: (tk, tn)   b_ref: (1, tn) f32
        # d_ref: (tm, Rp)   u_ref: (Rp, tn)   o_ref: (tm, tn)
        acc_ref = o_ref if acc_is_out else scratch[0]
        k = pl.program_id(2)

        # Fold the bias into the accumulator init (no per-step VPU add).
        @pl.when(k == 0)
        def _init():
            acc_ref[...] = jnp.broadcast_to(b_ref[...], acc_ref.shape)

        # Original-module path: accumulate x @ W on the MXU.
        acc_ref[...] += jnp.dot(x_ref[...], w_ref[...],
                                preferred_element_type=jnp.float32)

        # Epilogue: add the rank-R LoRA-up product and store.
        @pl.when(k == pl.num_programs(2) - 1)
        def _epilogue():
            out = acc_ref[...] + jnp.dot(d_ref[...], u_ref[...],
                                         preferred_element_type=jnp.float32)
            o_ref[...] = out.astype(o_ref.dtype)

    return kernel


# ----------------------------------------------------------------------------
# Per-layer weight preparation (hoisted out of the forward path).
# ----------------------------------------------------------------------------
class LoRAParams(NamedTuple):
    w_p: jax.Array          # (Kp, Np) org weight^T, compute dtype
    b_p: jax.Array          # (1, Np)  org bias, f32
    a_p: jax.Array          # (K, Rp)  lora_down^T, compute dtype
    u_p: jax.Array          # (Rp, Np) lora_up^T * coef, compute dtype
    K: int
    N: int
    Kp: int
    Np: int
    Rp: int
    tk: int
    tn: int
    tm_max: int
    compute_dtype: jnp.dtype


def prepare_lora_params(w, b, a, u, multiplier=1.0, alpha=1.0, *,
                        compute_dtype=jnp.bfloat16,
                        tm_max=512, tn_max=512, tk_max=1024):
    """Pad / transpose / coef-fold / cast weights once per layer.

    w: (out_dim, in_dim) original weight   b: (out_dim,) original bias
    a: (lora_dim, in_dim) lora_down        u: (out_dim, lora_dim) lora_up
    """
    N, K = w.shape
    R = a.shape[0]
    if alpha is None or alpha == 0:      # mirrors LoRAModule.__init__
        alpha = R
    coef = multiplier * (alpha / R)

    cdt = jnp.dtype(compute_dtype)
    tn = _pick_tile(N, 128, tn_max)
    tk = _pick_tile(K, 128, tk_max)
    Np = _round_up(_round_up(N, 128), tn)
    Kp = _round_up(_round_up(K, 128), tk)
    Rp = _round_up(R, 128)

    w_p = jnp.pad(w.T.astype(cdt), ((0, Kp - K), (0, Np - N)))
    b_p = jnp.pad(b.astype(jnp.float32).reshape(1, N), ((0, 0), (0, Np - N)))
    a_p = jnp.pad(a.T.astype(cdt), ((0, 0), (0, Rp - R)))
    u_p = jnp.pad((u.T * coef).astype(cdt), ((0, Rp - R), (0, Np - N)))
    return LoRAParams(w_p, b_p, a_p, u_p, int(K), int(N), int(Kp), int(Np),
                      int(Rp), int(tk), int(tn), int(tm_max), cdt)


# ----------------------------------------------------------------------------
# Forward wrappers.
# ----------------------------------------------------------------------------
def _lora_forward_2d(x2d, p: LoRAParams, out_dtype):
    M, K = x2d.shape
    assert K == p.K, f"feature dim {K} != prepared {p.K}"
    out_dtype = jnp.dtype(out_dtype)

    sub = max(_sublane_align(p.compute_dtype), _sublane_align(out_dtype))
    tm = _pick_tile(M, sub, p.tm_max)
    Mp = _round_up(_round_up(M, sub), tm)

    x_c = x2d.astype(p.compute_dtype)
    # LoRA-down hoisted out of the kernel: tiny (M,K)x(K,R) matmul in XLA.
    down = jnp.dot(x_c, p.a_p, preferred_element_type=jnp.float32)
    down = down.astype(p.compute_dtype)

    x_pad = jnp.pad(x_c, ((0, Mp - M), (0, p.Kp - K)))
    d_pad = jnp.pad(down, ((0, Mp - M), (0, 0)))

    grid = (Mp // tm, p.Np // p.tn, p.Kp // p.tk)
    total_steps = grid[0] * grid[1] * grid[2]

    def stream_spec(shape, index_map):
        # Deeper buffering only pays (and only makes sense) on non-trivial grids.
        if total_steps >= 4:
            return pl.BlockSpec(shape, index_map, pipeline_mode=pl.Buffered(3))
        return pl.BlockSpec(shape, index_map)

    acc_is_out = out_dtype == jnp.float32
    scratch_shapes = [] if acc_is_out else [pltpu.VMEM((tm, p.tn), jnp.float32)]

    out = pl.pallas_call(
        _make_lora_kernel(acc_is_out),
        out_shape=jax.ShapeDtypeStruct((Mp, p.Np), out_dtype),
        grid_spec=pltpu.PrefetchScalarGridSpec(
            num_scalar_prefetch=0,
            grid=grid,
            in_specs=[
                stream_spec((tm, p.tk), lambda i, j, k: (i, k)),      # x
                stream_spec((p.tk, p.tn), lambda i, j, k: (k, j)),    # W^T
                pl.BlockSpec((1, p.tn), lambda i, j, k: (0, j)),      # bias
                pl.BlockSpec((tm, p.Rp), lambda i, j, k: (i, 0)),     # x @ A^T
                pl.BlockSpec((p.Rp, p.tn), lambda i, j, k: (0, j)),   # U^T*coef
            ],
            out_specs=pl.BlockSpec((tm, p.tn), lambda i, j, k: (i, j)),
            scratch_shapes=scratch_shapes,
        ),
        compiler_params=pltpu.CompilerParams(
            dimension_semantics=("parallel", "parallel", "arbitrary"),
            vmem_limit_bytes=32 * 1024 * 1024,
        ),
    )(x_pad, p.w_p, p.b_p, d_pad, p.u_p)

    return out[:M, :p.N]


def lora_linear_forward(x, p: LoRAParams, out_dtype=None):
    """LoRAModule.forward for a Linear org module; x: (..., in_dim)."""
    out_dtype = x.dtype if out_dtype is None else out_dtype
    lead = x.shape[:-1]
    y2d = _lora_forward_2d(x.reshape(-1, x.shape[-1]), p, out_dtype)
    return y2d.reshape(*lead, p.N)


def lora_conv1x1_forward(x, p: LoRAParams, out_dtype=None):
    """LoRAModule.forward for a Conv2d(1x1) org module; x: (N, C_in, H, W)."""
    out_dtype = x.dtype if out_dtype is None else out_dtype
    n, c, h, w = x.shape
    x2d = jnp.transpose(x, (0, 2, 3, 1)).reshape(n * h * w, c)
    y2d = _lora_forward_2d(x2d, p, out_dtype)
    return jnp.transpose(y2d.reshape(n, h, w, p.N), (0, 3, 1, 2))


# ----------------------------------------------------------------------------
# Deterministic parameter construction (mirrors LoRAModule.__init__).
# ----------------------------------------------------------------------------
def make_lora_params(key, in_dim, out_dim, lora_dim):
    k_w, k_b, k_a = jax.random.split(key, 3)
    bound = 1.0 / math.sqrt(in_dim)           # PyTorch default Linear/Conv init
    w = jax.random.uniform(k_w, (out_dim, in_dim), jnp.float32, -bound, bound)
    b = jax.random.uniform(k_b, (out_dim,), jnp.float32, -bound, bound)
    # lora_down: kaiming_uniform_(a=sqrt(5)) -> bound = 1/sqrt(in_dim)
    a = jax.random.uniform(k_a, (lora_dim, in_dim), jnp.float32, -bound, bound)
    # lora_up: zeros_()
    u = jnp.zeros((out_dim, lora_dim), jnp.float32)
    return w, b, a, u


def reference_forward_2d(x2d, w, b, a, u, coef):
    return (x2d @ w.T + b) + ((x2d @ a.T) @ u.T) * coef


if __name__ == "__main__":
    key = jax.random.PRNGKey(0)
    multiplier = 1.0
    lora_dim = 4
    alpha = 1.0
    coef = multiplier * alpha / lora_dim

    (k_lin_x, k_lin_p, k_lin_u,
     k_conv_x, k_conv_p, k_conv_u) = jax.random.split(key, 6)

    # ---------------- Linear variant: (batch=2, seq=8, hidden=32) ----------------
    batch, seq, in_dim, out_dim = 2, 8, 32, 32
    x_lin = jax.random.normal(k_lin_x, (batch, seq, in_dim), jnp.float32)
    w, b, a, u = make_lora_params(k_lin_p, in_dim, out_dim, lora_dim)
    # make the LoRA path numerically non-trivial (module inits lora_up to 0).
    u = jax.random.uniform(k_lin_u, (out_dim, lora_dim), jnp.float32, -0.1, 0.1)

    ref_lin = reference_forward_2d(
        x_lin.reshape(-1, in_dim), w, b, a, u, coef).reshape(batch, seq, out_dim)

    # f32 compute path (exact numerics, exercises accumulate-into-output).
    p_f32 = prepare_lora_params(w, b, a, u, multiplier, alpha,
                                compute_dtype=jnp.float32)
    y_f32 = lora_linear_forward(x_lin, p_f32)
    jax.block_until_ready(y_f32)
    assert y_f32.shape == ref_lin.shape
    assert jnp.allclose(y_f32, ref_lin, atol=1e-4, rtol=1e-4)

    # bf16 compute path (MXU-native operands, f32 accumulation).
    p_bf16 = prepare_lora_params(w, b, a, u, multiplier, alpha,
                                 compute_dtype=jnp.bfloat16)
    y_bf16 = lora_linear_forward(x_lin, p_bf16)
    jax.block_until_ready(y_bf16)
    assert jnp.allclose(y_bf16.astype(jnp.float32), ref_lin,
                        atol=5e-2, rtol=5e-2)

    # ---------------- Conv2d(1x1) variant: x (2, 4, 16, 16) ----------------
    N_, Cin, H, W_ = 2, 4, 16, 16
    Cout = 8
    x_conv = jax.random.normal(k_conv_x, (N_, Cin, H, W_), jnp.float32)
    wc, bc, ac, uc = make_lora_params(k_conv_p, Cin, Cout, lora_dim)
    uc = jax.random.uniform(k_conv_u, (Cout, lora_dim), jnp.float32, -0.1, 0.1)

    p_conv = prepare_lora_params(wc, bc, ac, uc, multiplier, alpha,
                                 compute_dtype=jnp.bfloat16)
    # bf16 output exercises the f32-scratch epilogue path.
    y_conv = lora_conv1x1_forward(x_conv, p_conv, out_dtype=jnp.bfloat16)
    jax.block_until_ready(y_conv)

    xc2d = jnp.transpose(x_conv, (0, 2, 3, 1)).reshape(-1, Cin)
    ref_conv = jnp.transpose(
        reference_forward_2d(xc2d, wc, bc, ac, uc, coef).reshape(N_, H, W_, Cout),
        (0, 3, 1, 2))
    assert y_conv.shape == ref_conv.shape
    assert jnp.allclose(y_conv.astype(jnp.float32), ref_conv,
                        atol=5e-2, rtol=5e-2)

    print("KERNEL_OK")
</pallas_src>

<mosaic_0001>
module attributes {stable_mosaic.version = 11 : i64} {
  func.func @kernel(%arg0: i32, %arg1: i32, %arg2: i32, %arg3: memref<16x128xf32, #tpu.memory_space<vmem>>, %arg4: memref<128x128xf32, #tpu.memory_space<vmem>>, %arg5: memref<1x128xf32, #tpu.memory_space<vmem>>, %arg6: memref<16x128xf32, #tpu.memory_space<vmem>>, %arg7: memref<128x128xf32, #tpu.memory_space<vmem>>, %arg8: memref<16x128xf32, #tpu.memory_space<vmem>>) attributes {dimension_semantics = [#tpu.dimension_semantics<parallel>, #tpu.dimension_semantics<parallel>, #tpu.dimension_semantics<arbitrary>], iteration_bounds = array<i64: 1, 1, 1>, scalar_prefetch = 0 : i64, scratch_operands = 0 : i64, tpu.core_type = #tpu.core_type<tc>, window_params = [{transform_indices = @transform_0, window_bounds = array<i64: 16, 128>}, {transform_indices = @transform_1, window_bounds = array<i64: 128, 128>}, {transform_indices = @transform_2, window_bounds = array<i64: 1, 128>}, {transform_indices = @transform_3, window_bounds = array<i64: 16, 128>}, {transform_indices = @transform_4, window_bounds = array<i64: 128, 128>}, {transform_indices = @transform_5, window_bounds = array<i64: 16, 128>}]} {
    %c0_i32 = arith.constant 0 : i32
    %0 = arith.cmpi eq, %arg2, %c0_i32 : i32
    %1 = arith.extui %0 : i1 to i32
    %c0_i32_0 = arith.constant 0 : i32
    %2 = arith.cmpi ne, %1, %c0_i32_0 : i32
    scf.if %2 {
      %c0_10 = arith.constant 0 : index
      %c0_11 = arith.constant 0 : index
      %12 = vector.load %arg5[%c0_10, %c0_11] : memref<1x128xf32, #tpu.memory_space<vmem>>, vector<1x128xf32>
      %13 = vector.shape_cast %12 : vector<1x128xf32> to vector<1x128xf32>
      %14 = vector.broadcast %13 : vector<1x128xf32> to vector<16x128xf32>
      %c0_12 = arith.constant 0 : index
      %c0_13 = arith.constant 0 : index
      %15 = vector.load %arg8[%c0_12, %c0_13] : memref<16x128xf32, #tpu.memory_space<vmem>>, vector<16x128xf32>
      tpu.vector_store %arg8[%c0_12, %c0_13], %14 {strides = array<i32>} : memref<16x128xf32, #tpu.memory_space<vmem>>, vector<16x128xf32>,
    } else {
    }
    %c0 = arith.constant 0 : index
    %c0_1 = arith.constant 0 : index
    %3 = vector.load %arg8[%c0, %c0_1] : memref<16x128xf32, #tpu.memory_space<vmem>>, vector<16x128xf32>
    %c0_2 = arith.constant 0 : index
    %c0_3 = arith.constant 0 : index
    %4 = vector.load %arg3[%c0_2, %c0_3] : memref<16x128xf32, #tpu.memory_space<vmem>>, vector<16x128xf32>
    %c0_4 = arith.constant 0 : index
    %c0_5 = arith.constant 0 : index
    %5 = vector.load %arg4[%c0_4, %c0_5] : memref<128x128xf32, #tpu.memory_space<vmem>>, vector<128x128xf32>
    %cst = arith.constant dense<0.000000e+00> : vector<16x128xf32>
    %6 = tpu.matmul %4, %5, %cst {dimension_numbers = #tpu.dot_dimension_numbers<[1], [0], [0], [1], [0, 0, 1, 1], [], []>} : vector<16x128xf32>, vector<128x128xf32>, vector<16x128xf32> -> vector<16x128xf32>
    %7 = arith.addf %3, %6 : vector<16x128xf32>
    %c0_6 = arith.constant 0 : index
    %c0_7 = arith.constant 0 : index
    %8 = vector.load %arg8[%c0_6, %c0_7] : memref<16x128xf32, #tpu.memory_space<vmem>>, vector<16x128xf32>
    tpu.vector_store %arg8[%c0_6, %c0_7], %7 {strides = array<i32>} : memref<16x128xf32, #tpu.memory_space<vmem>>, vector<16x128xf32>,
    %c0_i32_8 = arith.constant 0 : i32
    %9 = arith.cmpi eq, %arg2, %c0_i32_8 : i32
    %10 = arith.extui %9 : i1 to i32
    %c0_i32_9 = arith.constant 0 : i32
    %11 = arith.cmpi ne, %10, %c0_i32_9 : i32
    scf.if %11 {
      %c0_10 = arith.constant 0 : index
      %c0_11 = arith.constant 0 : index
      %12 = vector.load %arg8[%c0_10, %c0_11] : memref<16x128xf32, #tpu.memory_space<vmem>>, vector<16x128xf32>
      %c0_12 = arith.constant 0 : index
      %c0_13 = arith.constant 0 : index
      %13 = vector.load %arg6[%c0_12, %c0_13] : memref<16x128xf32, #tpu.memory_space<vmem>>, vector<16x128xf32>
      %c0_14 = arith.constant 0 : index
      %c0_15 = arith.constant 0 : index
      %14 = vector.load %arg7[%c0_14, %c0_15] : memref<128x128xf32, #tpu.memory_space<vmem>>, vector<128x128xf32>
      %cst_16 = arith.constant dense<0.000000e+00> : vector<16x128xf32>
      %15 = tpu.matmul %13, %14, %cst_16 {dimension_numbers = #tpu.dot_dimension_numbers<[1], [0], [0], [1], [0, 0, 1, 1], [], []>} : vector<16x128xf32>, vector<128x128xf32>, vector<16x128xf32> -> vector<16x128xf32>
      %16 = arith.addf %12, %15 : vector<16x128xf32>
      %c0_17 = arith.constant 0 : index
      %c0_18 = arith.constant 0 : index
      %17 = vector.load %arg8[%c0_17, %c0_18] : memref<16x128xf32, #tpu.memory_space<vmem>>, vector<16x128xf32>
      tpu.vector_store %arg8[%c0_17, %c0_18], %16 {strides = array<i32>} : memref<16x128xf32, #tpu.memory_space<vmem>>, vector<16x128xf32>,
    } else {
    }
    return
  }
  func.func @transform_0(%arg0: i32, %arg1: i32, %arg2: i32) -> (i32, i32) {
    %c0_i32 = arith.constant 0 : i32
    return %arg0, %arg2 : i32, i32
  }
  func.func @transform_1(%arg0: i32, %arg1: i32, %arg2: i32) -> (i32, i32) {
    %c0_i32 = arith.constant 0 : i32
    return %arg2, %arg1 : i32, i32
  }
  func.func @transform_2(%arg0: i32, %arg1: i32, %arg2: i32) -> (i32, i32) {
    %c0_i32 = arith.constant 0 : i32
    %c0_i32_0 = arith.constant 0 : i32
    return %c0_i32, %arg1 : i32, i32
  }
  func.func @transform_3(%arg0: i32, %arg1: i32, %arg2: i32) -> (i32, i32) {
    %c0_i32 = arith.constant 0 : i32
    %c0_i32_0 = arith.constant 0 : i32
    return %arg0, %c0_i32 : i32, i32
  }
  func.func @transform_4(%arg0: i32, %arg1: i32, %arg2: i32) -> (i32, i32) {
    %c0_i32 = arith.constant 0 : i32
    %c0_i32_0 = arith.constant 0 : i32
    return %c0_i32, %arg1 : i32, i32
  }
  func.func @transform_5(%arg0: i32, %arg1: i32, %arg2: i32) -> (i32, i32) {
    %c0_i32 = arith.constant 0 : i32
    return %arg0, %arg1 : i32, i32
  }
}

</mosaic_0001>

<llo_original>
// kernel: tpu_custom_call.1
$region0: #{tpu_custom_call.1}
  #allocation0 [shape = 'u32[]', space=smem, size = 0x4, offset = 0x4, fixed_abs, tag = 'smem constant byte address 0x4 - core index']
  #allocation1 [shape = 'u32[72,128]{1,0:T(1,128)}', space=vmem, size = 0x9000, scoped, tag = 'internal scratch']
  %s0 = inlined_call_operand.hbm [shape: f32[16,128], index: 0, kind: input, shape index: {}]
  %s1 = inlined_call_operand.hbm [shape: f32[128,128], index: 1, kind: input, shape index: {}]
  %s2 = inlined_call_operand.vmem [shape: f32[1,128], index: 2, kind: input, shape index: {}]
  %s3 = inlined_call_operand.hbm [shape: f32[16,128], index: 3, kind: input, shape index: {}]
  %s4 = inlined_call_operand.hbm [shape: f32[128,128], index: 4, kind: input, shape index: {}]
  %s5 = inlined_call_operand.hbm [shape: f32[16,128], index: 5, kind: output, shape index: {}]
  %s6 = sld [smem:[#allocation0]]
  $region54: #{tpu_custom_call.1} parent=0
    _
  %s8 = ssub.s32 1, %s6
  %s9 = scalar_select 0, %s8, %s6
  $region1: #{tpu_custom_call.1} parent=0
    #allocation2 [shape = 'u8[8192]{0}', space=vmem, size = 0x2000, scoped, tag = 'input window, operand 0, single buffered']
    #allocation3 [shape = 's32[1]{0}', space=sflag, size = 0x4, scoped, tag = 'scoped memory for tpu_custom_call.1']
    #allocation4 [shape = 's32[1]{0}', space=sflag, size = 0x4, scoped, tag = 'scoped memory for tpu_custom_call.1']
    #allocation5 [shape = 'u8[65536]{0}', space=vmem, size = 0x10000, scoped, tag = 'input window, operand 1, single buffered']
    #allocation6 [shape = 's32[1]{0}', space=sflag, size = 0x4, scoped, tag = 'scoped memory for tpu_custom_call.1']
    #allocation7 [shape = 'u8[8192]{0}', space=vmem, size = 0x2000, scoped, tag = 'input window, operand 3, single buffered']
    #allocation8 [shape = 'u8[65536]{0}', space=vmem, size = 0x10000, scoped, tag = 'input window, operand 4, single buffered']
    #allocation9 [shape = 's32[1]{0}', space=sflag, size = 0x4, scoped, tag = 'scoped memory for tpu_custom_call.1']
    #allocation10 [shape = 'u8[8192]{0}', space=vmem, size = 0x2000, scoped, tag = 'output window, operand 0, single buffered']
    %10 = vsyncpa [#allocation3], 0
    %11 = vsyncpa [#allocation6], 0
    %12 = vsyncpa [#allocation9], 0
    %13 = vsyncpa [#allocation4], 0
    // Predicated region
    $region2: #{tpu_custom_call.1} parent=1 // pred_check
      _
    $region3: #{tpu_custom_call.1} parent=1 // pred_check_branch
      %15 = sbr.rel (0) target = $region5
    $region4: #{tpu_custom_call.1} parent=1 // pred_region
      %17 = vsyncadd [#allocation3], 0
      %s18 = sshll.u32 %s0, 4
      %s19 = int_to_ptr.hbm [resolvable:$true] %s18
      %s20 = sshll.u32 [#allocation2], 4
      %s21 = int_to_ptr.vmem [resolvable:$true] %s20
      %26 = dma.hbm_to_vmem [thread:$0]  %s19, 256, %s21, [#allocation3], 128, 128, 8
    $region5: #{tpu_custom_call.1} parent=1 // pred_fallthru
      _
    // Predicated region
    $region6: #{tpu_custom_call.1} parent=1 // pred_check
      _
    $region7: #{tpu_custom_call.1} parent=1 // pred_check_branch
      %28 = sbr.rel (0) target = $region9
    $region8: #{tpu_custom_call.1} parent=1 // pred_region
      %30 = vsyncadd [#allocation6], 0
      %s31 = sshll.u32 %s1, 4
      %s32 = int_to_ptr.hbm [resolvable:$true] %s31
      %s33 = sshll.u32 [#allocation5], 4
      %s34 = int_to_ptr.vmem [resolvable:$true] %s33
      %39 = dma.hbm_to_vmem [thread:$0]  %s32, 2048, %s34, [#allocation6], 128, 128, 8
    $region9: #{tpu_custom_call.1} parent=1 // pred_fallthru
      _
    // Predicated region
    $region10: #{tpu_custom_call.1} parent=1 // pred_check
      _
    $region11: #{tpu_custom_call.1} parent=1 // pred_check_branch
      %41 = sbr.rel (0) target = $region13
    $region12: #{tpu_custom_call.1} parent=1 // pred_region
      _
    $region13: #{tpu_custom_call.1} parent=1 // pred_fallthru
      _
    // Predicated region
    $region14: #{tpu_custom_call.1} parent=1 // pred_check
      _
    $region15: #{tpu_custom_call.1} parent=1 // pred_check_branch
      %43 = sbr.rel (0) target = $region17
    $region16: #{tpu_custom_call.1} parent=1 // pred_region
      %45 = vsyncadd [#allocation6], 0
      %s46 = sshll.u32 %s3, 4
      %s47 = int_to_ptr.hbm [resolvable:$true] %s46
      %s48 = sshll.u32 [#allocation7], 4
      %s49 = int_to_ptr.vmem [resolvable:$true] %s48
      %54 = dma.hbm_to_vmem [thread:$0]  %s47, 256, %s49, [#allocation6], 128, 128, 8
    $region17: #{tpu_custom_call.1} parent=1 // pred_fallthru
      _
    // Predicated region
    $region18: #{tpu_custom_call.1} parent=1 // pred_check
      _
    $region19: #{tpu_custom_call.1} parent=1 // pred_check_branch
      %56 = sbr.rel (0) target = $region21
    $region20: #{tpu_custom_call.1} parent=1 // pred_region
      %58 = vsyncadd [#allocation9], 0
      %s59 = sshll.u32 %s4, 4
      %s60 = int_to_ptr.hbm [resolvable:$true] %s59
      %s61 = sshll.u32 [#allocation8], 4
      %s62 = int_to_ptr.vmem [resolvable:$true] %s61
      %67 = dma.hbm_to_vmem [thread:$0]  %s60, 2048, %s62, [#allocation9], 128, 128, 8
    $region21: #{tpu_custom_call.1} parent=1 // pred_fallthru
      _
    // Predicated region
    $region22: #{tpu_custom_call.1} parent=1 // pred_check
      _
    $region23: #{tpu_custom_call.1} parent=1 // pred_check_branch
      %69 = sbr.rel (0) target = $region25
    $region24: #{tpu_custom_call.1} parent=1 // pred_region
      %71 = dma.done [#allocation3], 256
    $region25: #{tpu_custom_call.1} parent=1 // pred_fallthru
      _
    // Predicated region
    $region26: #{tpu_custom_call.1} parent=1 // pred_check
      _
    $region27: #{tpu_custom_call.1} parent=1 // pred_check_branch
      %73 = sbr.rel (0) target = $region29
    $region28: #{tpu_custom_call.1} parent=1 // pred_region
      %75 = dma.done [#allocation6], 2048
    $region29: #{tpu_custom_call.1} parent=1 // pred_fallthru
      _
    // Predicated region
    $region30: #{tpu_custom_call.1} parent=1 // pred_check
      _
    $region31: #{tpu_custom_call.1} parent=1 // pred_check_branch
      %77 = sbr.rel (0) target = $region33
    $region32: #{tpu_custom_call.1} parent=1 // pred_region
      %79 = dma.done [#allocation6], 256
    $region33: #{tpu_custom_call.1} parent=1 // pred_fallthru
      _
    // Predicated region
    $region34: #{tpu_custom_call.1} parent=1 // pred_check
      _
    $region35: #{tpu_custom_call.1} parent=1 // pred_check_branch
      %81 = sbr.rel (0) target = $region37
    $region36: #{tpu_custom_call.1} parent=1 // pred_region
      %83 = dma.done [#allocation9], 2048
    $region37: #{tpu_custom_call.1} parent=1 // pred_fallthru
      _
    %p84 = scmp.eq.s32.totalorder 0, 0
    // Predicated region
    $region38: #{tpu_custom_call.1} parent=1 // pred_check
      %p85 = pneg %p84
    $region39: #{tpu_custom_call.1} parent=1 // pred_check_branch
      %87 = sbr.rel (%p85) target = $region41
    $region40: #{tpu_custom_call.1} parent=1 // pred_region
      %v88 = vld [vmem:[%s2] sm:$0x1]
      %v90 = vperm.slane %v88, 0
      %92 = vst [vmem:[#allocation10] sm:$0xff] %v90
      %93 = vst [vmem:[#allocation10 + $0x8] sm:$0xff] %v90
    $region41: #{tpu_custom_call.1} parent=1 // pred_fallthru
      _
    %v94 = vld [vmem:[#allocation10] sm:$0xff]
    %v95 = vld [vmem:[#allocation10 + $0x8] sm:$0xff]
    %v96 = vld [vmem:[#allocation2] sm:$0xff]
    %v97 = vld [vmem:[#allocation2 + $0x8] sm:$0xff]
    %v98 = vld [vmem:[#allocation5] sm:$0xff]
    %v99 = vld [vmem:[#allocation5 + $0x8] sm:$0xff]
    %v100 = vld [vmem:[#allocation5 + $0x10] sm:$0xff]
    %v101 = vld [vmem:[#allocation5 + $0x18] sm:$0xff]
    %v102 = vld [vmem:[#allocation5 + $0x20] sm:$0xff]
    %v103 = vld [vmem:[#allocation5 + $0x28] sm:$0xff]
    %v104 = vld [vmem:[#allocation5 + $0x30] sm:$0xff]
    %v105 = vld [vmem:[#allocation5 + $0x38] sm:$0xff]
    %v106 = vld [vmem:[#allocation5 + $0x40] sm:$0xff]
    %v107 = vld [vmem:[#allocation5 + $0x48] sm:$0xff]
    %v108 = vld [vmem:[#allocation5 + $0x50] sm:$0xff]
    %v109 = vld [vmem:[#allocation5 + $0x58] sm:$0xff]
    %v110 = vld [vmem:[#allocation5 + $0x60] sm:$0xff]
    %v111 = vld [vmem:[#allocation5 + $0x68] sm:$0xff]
    %v112 = vld [vmem:[#allocation5 + $0x70] sm:$0xff]
    %v113 = vld [vmem:[#allocation5 + $0x78] sm:$0xff]
    %114 = vmatpush.msra.mxu0 %v113
    %115 = vmatpush.msra.mxu0 %v112
    %116 = vmatpush.msra.mxu0 %v111
    %117 = vmatpush.msra.mxu0 %v110
    %118 = vmatpush.msra.mxu0 %v109
    %119 = vmatpush.msra.mxu0 %v108
    %120 = vmatpush.msra.mxu0 %v107
    %121 = vmatpush.msra.mxu0 %v106
    %122 = vmatpush.msra.mxu0 %v105
    %123 = vmatpush.msra.mxu0 %v104
    %124 = vmatpush.msra.mxu0 %v103
    %125 = vmatpush.msra.mxu0 %v102
    %126 = vmatpush.msra.mxu0 %v101
    %127 = vmatpush.msra.mxu0 %v100
    %128 = vmatpush.msra.mxu0 %v99
    %129 = vmatpush.msra.mxu0 %v98
    %130 = vmatmul.f32.gmra.mxu0 %v96
    %v131 = vpop.f32.mrf.mxu0
    %v132 = vadd.f32 0.0, %v131
    %133 = vmatmul.f32.gmra.mxu0 %v97
    %v134 = vpop.f32.mrf.mxu0
    %v135 = vadd.f32 0.0, %v134
    %136 = vdwg.mxu0
    %v137 = vadd.f32 %v94, %v132
    %v138 = vadd.f32 %v95, %v135
    %139 = vst [vmem:[#allocation10] sm:$0xff] %v137
    %140 = vst [vmem:[#allocation10 + $0x8] sm:$0xff] %v138
    // Predicated region
    $region42: #{tpu_custom_call.1} parent=1 // pred_check
      %p141 = pneg %p84
    $region43: #{tpu_custom_call.1} parent=1 // pred_check_branch
      %143 = sbr.rel (%p141) target = $region45
    $region44: #{tpu_custom_call.1} parent=1 // pred_region
      %v144 = vld [vmem:[#allocation10] sm:$0xff]
      %v145 = vld [vmem:[#allocation10 + $0x8] sm:$0xff]
      %v146 = vld [vmem:[#allocation7] sm:$0xff]
      %v147 = vld [vmem:[#allocation7 + $0x8] sm:$0xff]
      %v148 = vld [vmem:[#allocation8] sm:$0xff]
      %v149 = vld [vmem:[#allocation8 + $0x8] sm:$0xff]
      %v150 = vld [vmem:[#allocation8 + $0x10] sm:$0xff]
      %v151 = vld [vmem:[#allocation8 + $0x18] sm:$0xff]
      %v152 = vld [vmem:[#allocation8 + $0x20] sm:$0xff]
      %v153 = vld [vmem:[#allocation8 + $0x28] sm:$0xff]
      %v154 = vld [vmem:[#allocation8 + $0x30] sm:$0xff]
      %v155 = vld [vmem:[#allocation8 + $0x38] sm:$0xff]
      %v156 = vld [vmem:[#allocation8 + $0x40] sm:$0xff]
      %v157 = vld [vmem:[#allocation8 + $0x48] sm:$0xff]
      %v158 = vld [vmem:[#allocation8 + $0x50] sm:$0xff]
      %v159 = vld [vmem:[#allocation8 + $0x58] sm:$0xff]
      %v160 = vld [vmem:[#allocation8 + $0x60] sm:$0xff]
      %v161 = vld [vmem:[#allocation8 + $0x68] sm:$0xff]
      %v162 = vld [vmem:[#allocation8 + $0x70] sm:$0xff]
      %v163 = vld [vmem:[#allocation8 + $0x78] sm:$0xff]
      %164 = vmatpush.msra.mxu0 %v163
      %165 = vmatpush.msra.mxu0 %v162
      %166 = vmatpush.msra.mxu0 %v161
      %167 = vmatpush.msra.mxu0 %v160
      %168 = vmatpush.msra.mxu0 %v159
      %169 = vmatpush.msra.mxu0 %v158
      %170 = vmatpush.msra.mxu0 %v157
      %171 = vmatpush.msra.mxu0 %v156
      %172 = vmatpush.msra.mxu0 %v155
      %173 = vmatpush.msra.mxu0 %v154
      %174 = vmatpush.msra.mxu0 %v153
      %175 = vmatpush.msra.mxu0 %v152
      %176 = vmatpush.msra.mxu0 %v151
      %177 = vmatpush.msra.mxu0 %v150
      %178 = vmatpush.msra.mxu0 %v149
      %179 = vmatpush.msra.mxu0 %v148
      %180 = vmatmul.f32.gmra.mxu0 %v146
      %v181 = vpop.f32.mrf.mxu0
      %v182 = vadd.f32 0.0, %v181
      %183 = vmatmul.f32.gmra.mxu0 %v147
      %v184 = vpop.f32.mrf.mxu0
      %v185 = vadd.f32 0.0, %v184
      %186 = vdwg.mxu0
      %v187 = vadd.f32 %v144, %v182
      %v188 = vadd.f32 %v145, %v185
      %189 = vst [vmem:[#allocation10] sm:$0xff] %v187
      %190 = vst [vmem:[#allocation10 + $0x8] sm:$0xff] %v188
    $region45: #{tpu_custom_call.1} parent=1 // pred_fallthru
      _
    // Predicated region
    $region46: #{tpu_custom_call.1} parent=1 // pred_check
      _
    $region47: #{tpu_custom_call.1} parent=1 // pred_check_branch
      %192 = sbr.rel (0) target = $region49
    $region48: #{tpu_custom_call.1} parent=1 // pred_region
      %194 = vsyncadd [#allocation4], 0
      %s195 = sshll.u32 [#allocation10], 4
      %s196 = int_to_ptr.vmem [resolvable:$true] %s195
      %s197 = sshll.u32 %s5, 4
      %s198 = int_to_ptr.hbm [resolvable:$true] %s197
      %203 = dma.vmem_to_hbm [thread:$0]  %s196, 256, %s198, [#allocation4], 128, 128, 8
    $region49: #{tpu_custom_call.1} parent=1 // pred_fallthru
      _
    // Predicated region
    $region50: #{tpu_custom_call.1} parent=1 // pred_check
      _
    $region51: #{tpu_custom_call.1} parent=1 // pred_check_branch
      %205 = sbr.rel (0) target = $region53
    $region52: #{tpu_custom_call.1} parent=1 // pred_region
      %207 = dma.done [#allocation4], 256
    $region53: #{tpu_custom_call.1} parent=1 // pred_fallthru
      _
    %208 = vsyncpa [#allocation3], 1
    %209 = vsyncpa [#allocation6], 1
    %210 = vsyncpa [#allocation9], 1
    %211 = vsyncpa [#allocation4], 1

</llo_original>
